<compile_context>
chip_gen: v7x
topology: tpu7x:2x2x1
jax: 0.10.0
libtpu: 0.0.40
codegen_flags: <defaults>
</compile_context>

<pallas_src>
import jax
import jax.numpy as jnp
from jax.experimental import pallas as pl
from jax.experimental.pallas import tpu as pltpu


LANE = 128      # lane width: pad hidden / padded-class matmul dims to this
SUBLANE = 8     # sublane width: batch tiles are multiples of this


def _round_up(n: int, m: int) -> int:
    return ((n + m - 1) // m) * m


def mlp_kernel(x_ref, w1_ref, b1_ref, w2_ref, b2_ref, out_ref):
    # Two MXU matmuls (bf16 inputs, f32 accumulation) + f32 bias/ReLU.
    x = x_ref[...]                                                    # (TB, in_f) f32
    h = jnp.dot(x.astype(w1_ref.dtype), w1_ref[...],
                preferred_element_type=jnp.float32)                   # (TB, Hp) f32
    h = jnp.maximum(h + b1_ref[...], 0.0)                             # bias + ReLU (f32 VPU)
    o = jnp.dot(h.astype(w2_ref.dtype), w2_ref[...],
                preferred_element_type=jnp.float32)                   # (TB, Cp) f32
    n_cls = out_ref.shape[-1]
    # Store only the real classes -> small HBM writeback (masked vst).
    out_ref[...] = (o[:, :n_cls] + b2_ref[...]).astype(out_ref.dtype)


def prepare_params(w1, b1, w2, b2, compute_dtype=jnp.bfloat16):
    """One-time param prep (do this at init, NOT per forward call).

    w1: (hidden, input) torch layout, w2: (classes, hidden) torch layout.
    Weights are pre-transposed to (in, out), cast to `compute_dtype`
    (bf16 by default: MXU-native, half the DMA/VMEM), and the hidden /
    padded-class matmul dims are zero-padded to multiples of 128.
    Zero padding is semantics-preserving: padded w1 cols + b1 entries are 0
    (ReLU(0)=0) and padded w2 rows are 0 (contribute nothing).  Biases stay
    f32 and 2-D.  Returns params + the true num_classes.
    """
    hidden, in_f = w1.shape
    classes = w2.shape[0]
    hid_p = _round_up(hidden, LANE)
    out_p = _round_up(classes, LANE)

    w1t = jnp.zeros((in_f, hid_p), compute_dtype).at[:, :hidden].set(
        w1.T.astype(compute_dtype))
    b1p = jnp.zeros((1, hid_p), jnp.float32).at[:, :hidden].set(
        b1.astype(jnp.float32))
    w2t = jnp.zeros((hid_p, out_p), compute_dtype).at[:hidden, :classes].set(
        w2.T.astype(compute_dtype))
    b2p = b2.reshape(1, classes).astype(jnp.float32)
    return (w1t, b1p, w2t, b2p), classes


def simple_mlp_forward(x, params, num_classes, tile_b=1024):
    """x: (B, input_size) f32; params from prepare_params(). Returns (B, num_classes) f32."""
    w1t, b1p, w2t, b2p = params
    B, in_f = x.shape
    hid_p = w1t.shape[1]
    out_p = w2t.shape[1]

    # Batch tiling: multiples of the sublane width; cap at ~B/2 so the grid
    # has >=2 steps when the batch is big enough (lets "parallel" semantics
    # shard across v7x's 2 TensorCores).  No jnp.pad of x: cdiv grid + Pallas
    # partial-block masking handle a non-divisible batch.
    tile_b = _round_up(max(tile_b, SUBLANE), SUBLANE)
    half_b = _round_up(pl.cdiv(B, 2), SUBLANE)
    tile_b = max(SUBLANE, min(tile_b, half_b))
    grid = (pl.cdiv(B, tile_b),)

    out = pl.pallas_call(
        mlp_kernel,
        out_shape=jax.ShapeDtypeStruct((B, num_classes), jnp.float32),
        grid=grid,
        in_specs=[
            # x: tiled over batch
            pl.BlockSpec((tile_b, in_f), lambda i: (i, 0)),
            # weights / biases: constant block index -> VMEM-resident across steps
            pl.BlockSpec((in_f, hid_p), lambda i: (0, 0)),
            pl.BlockSpec((1, hid_p), lambda i: (0, 0)),
            pl.BlockSpec((hid_p, out_p), lambda i: (0, 0)),
            pl.BlockSpec((1, num_classes), lambda i: (0, 0)),
        ],
        # True-width output: tiny HBM writeback, no post-kernel slice needed.
        out_specs=pl.BlockSpec((tile_b, num_classes), lambda i: (i, 0)),
        compiler_params=pltpu.CompilerParams(
            # batch axis is independent -> shard across v7x's 2 TensorCores
            dimension_semantics=("parallel",),
        ),
    )(x, w1t, b1p, w2t, b2p)
    return out


def init_params(key, input_size, hidden_size, num_classes):
    """Deterministic init mimicking nn.Linear's uniform(-1/sqrt(fan_in), 1/sqrt(fan_in))."""
    k1, k2, k3, k4 = jax.random.split(key, 4)
    bound1 = 1.0 / jnp.sqrt(input_size)
    bound2 = 1.0 / jnp.sqrt(hidden_size)
    w1 = jax.random.uniform(k1, (hidden_size, input_size), jnp.float32, -bound1, bound1)
    b1 = jax.random.uniform(k2, (hidden_size,), jnp.float32, -bound1, bound1)
    w2 = jax.random.uniform(k3, (num_classes, hidden_size), jnp.float32, -bound2, bound2)
    b2 = jax.random.uniform(k4, (num_classes,), jnp.float32, -bound2, bound2)
    return w1, b1, w2, b2


if __name__ == "__main__":
    # Iris-like shapes: 4 features, 3 classes, small hidden layer, small batch.
    batch, input_size, hidden_size, num_classes = 8, 4, 32, 3

    key = jax.random.PRNGKey(0)
    kx, kp = jax.random.split(key)
    x = jax.random.normal(kx, (batch, input_size), jnp.float32)
    w1, b1, w2, b2 = init_params(kp, input_size, hidden_size, num_classes)

    # One-time param prep (transpose + bf16 cast + lane padding, not per call).
    params, n_classes = prepare_params(w1, b1, w2, b2)

    out = simple_mlp_forward(x, params, n_classes)
    out = jax.block_until_ready(out)

    # Pure-JAX f32 reference of the same semantics (torch layout).
    # Tolerance loosened because the kernel's dot inputs are bf16 (f32 accum).
    ref = jnp.maximum(x @ w1.T + b1, 0.0) @ w2.T + b2
    assert out.shape == (batch, num_classes)
    assert jnp.allclose(out, ref, atol=2e-2, rtol=2e-2)

    print("KERNEL_OK")
</pallas_src>

<mosaic_0001>
module attributes {stable_mosaic.version = 11 : i64} {
  func.func @mlp_kernel(%arg0: i32, %arg1: memref<8x4xf32, #tpu.memory_space<vmem>>, %arg2: memref<4x128xbf16, #tpu.memory_space<vmem>>, %arg3: memref<1x128xf32, #tpu.memory_space<vmem>>, %arg4: memref<128x128xbf16, #tpu.memory_space<vmem>>, %arg5: memref<1x3xf32, #tpu.memory_space<vmem>>, %arg6: memref<8x3xf32, #tpu.memory_space<vmem>>) attributes {dimension_semantics = [#tpu.dimension_semantics<parallel>], iteration_bounds = array<i64: 1>, scalar_prefetch = 0 : i64, scratch_operands = 0 : i64, tpu.core_type = #tpu.core_type<tc>, window_params = [{transform_indices = @transform_0, window_bounds = array<i64: 8, 4>}, {pipeline_mode = #tpu.pipeline_mode<synchronous>, transform_indices = @transform_1, window_bounds = array<i64: 4, 128>}, {pipeline_mode = #tpu.pipeline_mode<synchronous>, transform_indices = @transform_2, window_bounds = array<i64: 1, 128>}, {pipeline_mode = #tpu.pipeline_mode<synchronous>, transform_indices = @transform_3, window_bounds = array<i64: 128, 128>}, {pipeline_mode = #tpu.pipeline_mode<synchronous>, transform_indices = @transform_4, window_bounds = array<i64: 1, 3>}, {transform_indices = @transform_5, window_bounds = array<i64: 8, 3>}]} {
    %c0 = arith.constant 0 : index
    %c0_0 = arith.constant 0 : index
    %0 = vector.load %arg1[%c0, %c0_0] : memref<8x4xf32, #tpu.memory_space<vmem>>, vector<8x4xf32>
    %1 = arith.truncf %0 : vector<8x4xf32> to vector<8x4xbf16>
    %c0_1 = arith.constant 0 : index
    %c0_2 = arith.constant 0 : index
    %2 = vector.load %arg2[%c0_1, %c0_2] : memref<4x128xbf16, #tpu.memory_space<vmem>>, vector<4x128xbf16>
    %cst = arith.constant dense<0.000000e+00> : vector<8x128xf32>
    %3 = tpu.matmul %1, %2, %cst {dimension_numbers = #tpu.dot_dimension_numbers<[1], [0], [0], [1], [0, 0, 1, 1], [], []>} : vector<8x4xbf16>, vector<4x128xbf16>, vector<8x128xf32> -> vector<8x128xf32>
    %c0_3 = arith.constant 0 : index
    %c0_4 = arith.constant 0 : index
    %4 = vector.load %arg3[%c0_3, %c0_4] : memref<1x128xf32, #tpu.memory_space<vmem>>, vector<1x128xf32>
    %5 = vector.broadcast %4 : vector<1x128xf32> to vector<8x128xf32>
    %6 = arith.addf %3, %5 : vector<8x128xf32>
    %cst_5 = arith.constant 0.000000e+00 : f32
    %7 = vector.broadcast %cst_5 : f32 to vector<8x128xf32>
    %8 = arith.maximumf %6, %7 : vector<8x128xf32>
    %9 = arith.truncf %8 : vector<8x128xf32> to vector<8x128xbf16>
    %c0_6 = arith.constant 0 : index
    %c0_7 = arith.constant 0 : index
    %10 = vector.load %arg4[%c0_6, %c0_7] : memref<128x128xbf16, #tpu.memory_space<vmem>>, vector<128x128xbf16>
    %cst_8 = arith.constant dense<0.000000e+00> : vector<8x128xf32>
    %11 = tpu.matmul %9, %10, %cst_8 {dimension_numbers = #tpu.dot_dimension_numbers<[1], [0], [0], [1], [0, 0, 1, 1], [], []>} : vector<8x128xbf16>, vector<128x128xbf16>, vector<8x128xf32> -> vector<8x128xf32>
    %12 = vector.extract_strided_slice %11 {offsets = [0, 0], sizes = [8, 3], strides = [1, 1]} : vector<8x128xf32> to vector<8x3xf32>
    %c0_9 = arith.constant 0 : index
    %c0_10 = arith.constant 0 : index
    %13 = vector.load %arg5[%c0_9, %c0_10] : memref<1x3xf32, #tpu.memory_space<vmem>>, vector<1x3xf32>
    %14 = vector.broadcast %13 : vector<1x3xf32> to vector<8x3xf32>
    %15 = arith.addf %12, %14 : vector<8x3xf32>
    %c0_11 = arith.constant 0 : index
    %c0_12 = arith.constant 0 : index
    %16 = vector.load %arg6[%c0_11, %c0_12] : memref<8x3xf32, #tpu.memory_space<vmem>>, vector<8x3xf32>
    tpu.vector_store %arg6[%c0_11, %c0_12], %15 {strides = array<i32>} : memref<8x3xf32, #tpu.memory_space<vmem>>, vector<8x3xf32>,
    return
  }
  func.func @transform_0(%arg0: i32) -> (i32, i32) {
    %c0_i32 = arith.constant 0 : i32
    %c0_i32_0 = arith.constant 0 : i32
    return %arg0, %c0_i32 : i32, i32
  }
  func.func @transform_1(%arg0: i32) -> (i32, i32) {
    %c0_i32 = arith.constant 0 : i32
    %c0_i32_0 = arith.constant 0 : i32
    %c0_i32_1 = arith.constant 0 : i32
    return %c0_i32, %c0_i32_0 : i32, i32
  }
  func.func @transform_2(%arg0: i32) -> (i32, i32) {
    %c0_i32 = arith.constant 0 : i32
    %c0_i32_0 = arith.constant 0 : i32
    %c0_i32_1 = arith.constant 0 : i32
    return %c0_i32, %c0_i32_0 : i32, i32
  }
  func.func @transform_3(%arg0: i32) -> (i32, i32) {
    %c0_i32 = arith.constant 0 : i32
    %c0_i32_0 = arith.constant 0 : i32
    %c0_i32_1 = arith.constant 0 : i32
    return %c0_i32, %c0_i32_0 : i32, i32
  }
  func.func @transform_4(%arg0: i32) -> (i32, i32) {
    %c0_i32 = arith.constant 0 : i32
    %c0_i32_0 = arith.constant 0 : i32
    %c0_i32_1 = arith.constant 0 : i32
    return %c0_i32, %c0_i32_0 : i32, i32
  }
  func.func @transform_5(%arg0: i32) -> (i32, i32) {
    %c0_i32 = arith.constant 0 : i32
    %c0_i32_0 = arith.constant 0 : i32
    return %arg0, %c0_i32 : i32, i32
  }
}

</mosaic_0001>

<llo_original>
// kernel: tpu_custom_call.1
$region0: #{tpu_custom_call.1}
  #allocation0 [shape = 'u32[]', space=smem, size = 0x4, offset = 0x4, fixed_abs, tag = 'smem constant byte address 0x4 - core index']
  #allocation1 [shape = 'u32[144,128]{1,0:T(1,128)}', space=vmem, size = 0x12000, scoped, tag = 'internal scratch']
  %s0 = inlined_call_operand.vmem [shape: f32[8,4], index: 0, kind: input, shape index: {}]
  %s1 = inlined_call_operand.vmem [shape: bf16[4,128], index: 1, kind: input, shape index: {}]
  %s2 = inlined_call_operand.vmem [shape: f32[1,128], index: 2, kind: input, shape index: {}]
  %s3 = inlined_call_operand.hbm [shape: bf16[128,128], index: 3, kind: input, shape index: {}]
  %s4 = inlined_call_operand.vmem [shape: f32[1,3], index: 4, kind: input, shape index: {}]
  %s5 = inlined_call_operand.vmem [shape: f32[8,3], index: 5, kind: output, shape index: {}]
  %s6 = sld [smem:[#allocation0]]
  $region34: #{tpu_custom_call.1} parent=0
    _
  %s8 = ssub.s32 1, %s6
  %s9 = scalar_select 0, %s8, %s6
  $region1: #{tpu_custom_call.1} parent=0
    #allocation2 [shape = 'u8[32768]{0}', space=vmem, size = 0x8000, scoped, tag = 'input window, operand 3, single buffered']
    #allocation3 [shape = 's32[1]{0}', space=sflag, size = 0x4, scoped, tag = 'scoped memory for tpu_custom_call.1']
    %10 = vsyncpa [#allocation3], 0
    // Predicated region
    $region2: #{tpu_custom_call.1} parent=1 // pred_check
      _
    $region3: #{tpu_custom_call.1} parent=1 // pred_check_branch
      %12 = sbr.rel (0) target = $region5
    $region4: #{tpu_custom_call.1} parent=1 // pred_region
      _
    $region5: #{tpu_custom_call.1} parent=1 // pred_fallthru
      _
    // Predicated region
    $region6: #{tpu_custom_call.1} parent=1 // pred_check
      _
    $region7: #{tpu_custom_call.1} parent=1 // pred_check_branch
      %14 = sbr.rel (0) target = $region9
    $region8: #{tpu_custom_call.1} parent=1 // pred_region
      _
    $region9: #{tpu_custom_call.1} parent=1 // pred_fallthru
      _
    // Predicated region
    $region10: #{tpu_custom_call.1} parent=1 // pred_check
      _
    $region11: #{tpu_custom_call.1} parent=1 // pred_check_branch
      %16 = sbr.rel (0) target = $region13
    $region12: #{tpu_custom_call.1} parent=1 // pred_region
      _
    $region13: #{tpu_custom_call.1} parent=1 // pred_fallthru
      _
    // Predicated region
    $region14: #{tpu_custom_call.1} parent=1 // pred_check
      _
    $region15: #{tpu_custom_call.1} parent=1 // pred_check_branch
      %18 = sbr.rel (0) target = $region17
    $region16: #{tpu_custom_call.1} parent=1 // pred_region
      %s20 = ssub.s32 1024, 1024
      %21 = vsyncadd [#allocation3], %s20
      %s22 = sshll.u32 [#allocation2], 4
      %s23 = int_to_ptr.vmem [resolvable:$true] %s22
      %28 = dma.hbm_to_vmem [thread:$0]  %s3, 1024, %s23, [#allocation3], 64, 64, 4
    $region17: #{tpu_custom_call.1} parent=1 // pred_fallthru
      _
    // Predicated region
    $region18: #{tpu_custom_call.1} parent=1 // pred_check
      _
    $region19: #{tpu_custom_call.1} parent=1 // pred_check_branch
      %30 = sbr.rel (0) target = $region21
    $region20: #{tpu_custom_call.1} parent=1 // pred_region
      _
    $region21: #{tpu_custom_call.1} parent=1 // pred_fallthru
      _
    // Predicated region
    $region22: #{tpu_custom_call.1} parent=1 // pred_check
      _
    $region23: #{tpu_custom_call.1} parent=1 // pred_check_branch
      %32 = sbr.rel (0) target = $region25
    $region24: #{tpu_custom_call.1} parent=1 // pred_region
      %33 = dma.done [#allocation3], 1024
    $region25: #{tpu_custom_call.1} parent=1 // pred_fallthru
      _
    %v35 = vld [vmem:[%s0] sm:$0xff]
    %v36 = vpack.c.bf16 %v35, %v35
    %v37 = vld [vmem:[%s1] sm:$0x3]
    %v38 = vld [vmem:[%s2] sm:$0x1]
    %v40 = vlaneseq
    %v41 = vshrl.u32 %v40, 7
    %v42 = vsub.s32 0, %v41
    %v43 = vrot.slane %v38, %v42
    %vm45 = vcmask 31744
    %v47 = vsel %vm45, %v36, 0
    %vm49 = vcmask 1041408
    %v51 = vsel %vm49, %v37, 0
    %53 = vmatprep.subr.bf16.mxu0 0
    %54 = vmatpush1.bf16.msra.mxu0 %v51
    %55 = vmatprep.subr.bf16.mxu0 0
    %56 = vmatpush1.bf16.msra.mxu0 0
    %57 = vmatprep.subr.bf16.mxu0 0
    %58 = vmatpush1.bf16.msra.mxu0 0
    %59 = vmatprep.subr.bf16.mxu0 0
    %60 = vmatpush1.bf16.msra.mxu0 0
    %61 = vmatprep.subr.bf16.mxu0 0
    %62 = vmatpush1.bf16.msra.mxu0 0
    %63 = vmatprep.subr.bf16.mxu0 0
    %64 = vmatpush1.bf16.msra.mxu0 0
    %65 = vmatprep.subr.bf16.mxu0 0
    %66 = vmatpush1.bf16.msra.mxu0 0
    %67 = vmatprep.subr.bf16.mxu0 0
    %68 = vmatpush1.bf16.msra.mxu0 0
    %69 = vmatprep.subr.bf16.mxu0 0
    %70 = vmatpush1.bf16.msra.mxu0 0
    %71 = vmatprep.subr.bf16.mxu0 0
    %72 = vmatpush1.bf16.msra.mxu0 0
    %73 = vmatprep.subr.bf16.mxu0 0
    %74 = vmatpush1.bf16.msra.mxu0 0
    %75 = vmatprep.subr.bf16.mxu0 0
    %76 = vmatpush1.bf16.msra.mxu0 0
    %77 = vmatprep.subr.bf16.mxu0 0
    %78 = vmatpush1.bf16.msra.mxu0 0
    %79 = vmatprep.subr.bf16.mxu0 0
    %80 = vmatpush1.bf16.msra.mxu0 0
    %81 = vmatprep.subr.bf16.mxu0 0
    %82 = vmatpush1.bf16.msra.mxu0 0
    %83 = vmatprep.subr.bf16.mxu0 0
    %84 = vmatpush1.bf16.msra.mxu0 0
    %85 = vmatprep.mubr.bf16.mxu0 0
    %86 = vmatmul.mubr.bf16.gmra.mrb[0].mxu0 %v47
    %v87 = vpop.f32.mrb[0].mxu0
    %v88 = vadd.f32 %v43, %v87
    %v89 = vpop.f32.mrb[0].mxu0
    %v90 = vpop.f32.mrb[0].mxu0
    %v91 = vpop.f32.mrb[0].mxu0
    %92 = vdwg.mxu0
    %v93 = vmax.f32 %v88, 0.0
    %v94 = vpack.c.bf16 %v93, %v93
    %v95 = vld [vmem:[#allocation2] sm:$0xf]
    %v96 = vld [vmem:[#allocation2 + $0x4] sm:$0xf]
    %v97 = vld [vmem:[#allocation2 + $0x8] sm:$0xf]
    %v98 = vld [vmem:[#allocation2 + $0xc] sm:$0xf]
    %v99 = vld [vmem:[#allocation2 + $0x10] sm:$0xf]
    %v100 = vld [vmem:[#allocation2 + $0x14] sm:$0xf]
    %v101 = vld [vmem:[#allocation2 + $0x18] sm:$0xf]
    %v102 = vld [vmem:[#allocation2 + $0x1c] sm:$0xf]
    %v103 = vld [vmem:[#allocation2 + $0x20] sm:$0xf]
    %v104 = vld [vmem:[#allocation2 + $0x24] sm:$0xf]
    %v105 = vld [vmem:[#allocation2 + $0x28] sm:$0xf]
    %v106 = vld [vmem:[#allocation2 + $0x2c] sm:$0xf]
    %v107 = vld [vmem:[#allocation2 + $0x30] sm:$0xf]
    %v108 = vld [vmem:[#allocation2 + $0x34] sm:$0xf]
    %v109 = vld [vmem:[#allocation2 + $0x38] sm:$0xf]
    %v110 = vld [vmem:[#allocation2 + $0x3c] sm:$0xf]
    %v127 = vunpack.c.l.b16 %v95
    %v128 = vunpack.c.l.b16 %v96
    %v129 = vunpack.c.l.b16 %v97
    %v130 = vunpack.c.l.b16 %v98
    %v131 = vunpack.c.l.b16 %v99
    %v132 = vunpack.c.l.b16 %v100
    %v133 = vunpack.c.l.b16 %v101
    %v134 = vunpack.c.l.b16 %v102
    %v135 = vunpack.c.l.b16 %v103
    %v136 = vunpack.c.l.b16 %v104
    %v137 = vunpack.c.l.b16 %v105
    %v138 = vunpack.c.l.b16 %v106
    %v139 = vunpack.c.l.b16 %v107
    %v140 = vunpack.c.l.b16 %v108
    %v141 = vunpack.c.l.b16 %v109
    %v142 = vunpack.c.l.b16 %v110
    %v143 = vpack.c.b16 %v128, %v127
    %v144 = vpack.c.b16 %v130, %v129
    %v145 = vpack.c.b16 %v132, %v131
    %v146 = vpack.c.b16 %v134, %v133
    %v147 = vpack.c.b16 %v136, %v135
    %v148 = vpack.c.b16 %v138, %v137
    %v149 = vpack.c.b16 %v140, %v139
    %v150 = vpack.c.b16 %v142, %v141
    %159 = vmatprep.subr.bf16.mxu0 0
    %160 = vmatpush1.bf16.msra.mxu0 %v143
    %161 = vmatprep.subr.bf16.mxu0 0
    %162 = vmatpush1.bf16.msra.mxu0 %v144
    %163 = vmatprep.subr.bf16.mxu0 0
    %164 = vmatpush1.bf16.msra.mxu0 %v145
    %165 = vmatprep.subr.bf16.mxu0 0
    %166 = vmatpush1.bf16.msra.mxu0 %v146
    %167 = vmatprep.subr.bf16.mxu0 0
    %168 = vmatpush1.bf16.msra.mxu0 %v147
    %169 = vmatprep.subr.bf16.mxu0 0
    %170 = vmatpush1.bf16.msra.mxu0 %v148
    %171 = vmatprep.subr.bf16.mxu0 0
    %172 = vmatpush1.bf16.msra.mxu0 %v149
    %173 = vmatprep.subr.bf16.mxu0 0
    %174 = vmatpush1.bf16.msra.mxu0 %v150
    %175 = vmatprep.subr.bf16.mxu0 0
    %176 = vmatpush1.bf16.msra.mxu0 0
    %177 = vmatprep.subr.bf16.mxu0 0
    %178 = vmatpush1.bf16.msra.mxu0 0
    %179 = vmatprep.subr.bf16.mxu0 0
    %180 = vmatpush1.bf16.msra.mxu0 0
    %181 = vmatprep.subr.bf16.mxu0 0
    %182 = vmatpush1.bf16.msra.mxu0 0
    %183 = vmatprep.subr.bf16.mxu0 0
    %184 = vmatpush1.bf16.msra.mxu0 0
    %185 = vmatprep.subr.bf16.mxu0 0
    %186 = vmatpush1.bf16.msra.mxu0 0
    %187 = vmatprep.subr.bf16.mxu0 0
    %188 = vmatpush1.bf16.msra.mxu0 0
    %189 = vmatprep.subr.bf16.mxu0 0
    %190 = vmatpush1.bf16.msra.mxu0 0
    %191 = vmatprep.mubr.bf16.mxu0 0
    %192 = vmatmul.mubr.bf16.gmra.mrb[0].mxu0 %v94
    %v193 = vpop.f32.mrb[0].mxu0
    %v194 = vadd.f32 0.0, %v193
    %v195 = vpop.f32.mrb[0].mxu0
    %v196 = vpop.f32.mrb[0].mxu0
    %v197 = vpop.f32.mrb[0].mxu0
    %198 = vdwg.mxu0
    %v199 = vld [vmem:[%s4] sm:$0x1]
    %v201 = vlaneseq
    %v202 = vshrl.u32 %v201, 7
    %v203 = vsub.s32 0, %v202
    %v204 = vrot.slane %v199, %v203
    %v206 = vadd.f32 %v194, %v204
    %vm207 = vcmask 23552
    %208 = vst.msk [vmem:[%s5] sm:$0xff] %vm207, %v206
    // Predicated region
    $region26: #{tpu_custom_call.1} parent=1 // pred_check
      _
    $region27: #{tpu_custom_call.1} parent=1 // pred_check_branch
      %210 = sbr.rel (0) target = $region29
    $region28: #{tpu_custom_call.1} parent=1 // pred_region
      _
    $region29: #{tpu_custom_call.1} parent=1 // pred_fallthru
      _
    // Predicated region
    $region30: #{tpu_custom_call.1} parent=1 // pred_check
      _
    $region31: #{tpu_custom_call.1} parent=1 // pred_check_branch
      %212 = sbr.rel (0) target = $region33
    $region32: #{tpu_custom_call.1} parent=1 // pred_region
      _
    $region33: #{tpu_custom_call.1} parent=1 // pred_fallthru
      _
    %213 = vsyncpa [#allocation3], 1

</llo_original>
